<compile_context>
chip_gen: v7x
topology: tpu7x:2x2x1
jax: 0.10.0
libtpu: 0.0.40
codegen_flags: <defaults>
</compile_context>

<pallas_src>
import jax
import jax.numpy as jnp
from jax.experimental import pallas as pl
from jax.experimental.pallas import tpu as pltpu


def moe_gate_kernel(x_ref, w_ref, o_ref):
    """One (tm, E_pad) fp32 logits tile; grid axis 1 iterates the K (hidden) dim.

    x_ref: (tm, tk)     activations in their HBM dtype (fp32 or bf16)
    w_ref: (tk, E_pad)  bf16 gate weight, pre-transposed in the wrapper
    o_ref: (tm, E_pad)  fp32 logits tile (resident across the K axis)
    """
    k = pl.program_id(1)

    # In-kernel VPU cast (hides under the MXU); canonical A @ B, fp32 accum.
    x_bf = x_ref[...].astype(jnp.bfloat16)
    partial = jnp.dot(x_bf, w_ref[...], preferred_element_type=jnp.float32)

    @pl.when(k == 0)
    def _():
        o_ref[...] = partial

    @pl.when(k != 0)
    def _():
        o_ref[...] = o_ref[...] + partial


def _round_up(x, m):
    return (x + m - 1) // m * m


def _hw_params():
    """Generation-aware VMEM budget / tiling policy (inferred from VMEM size)."""
    vmem_cap = None
    try:
        info = pltpu.get_tpu_info()
        vmem_cap = int(getattr(info, "vmem_capacity_bytes"))
    except Exception:
        vmem_cap = None

    if vmem_cap is not None and vmem_cap > 96 * 1024 * 1024:
        # v5e / v6e class: 128 MiB VMEM, single TensorCore -> do not split M
        # for small batches, allow big K tiles.
        return dict(vmem_limit=96 * 1024 * 1024,
                    vmem_budget=72 * 1024 * 1024,
                    min_m_blocks=1,
                    tm_cap=512)
    if vmem_cap is not None:
        # v7x class: 64 MiB VMEM per core, 2 TensorCores -> keep >= 2 M blocks.
        return dict(vmem_limit=32 * 1024 * 1024,
                    vmem_budget=24 * 1024 * 1024,
                    min_m_blocks=2,
                    tm_cap=512)
    # Unknown: conservative VMEM, no forced M split (splitting only helps 2-TC).
    return dict(vmem_limit=32 * 1024 * 1024,
                vmem_budget=24 * 1024 * 1024,
                min_m_blocks=1,
                tm_cap=512)


def moe_gate_forward(hidden_states, weight, *, tm=None, tk=None):
    """logits = hidden_states @ weight.T  (F.linear(x, W, None)) via Pallas."""
    T, H = hidden_states.shape
    E, H2 = weight.shape
    assert H == H2, "hidden_size mismatch"

    hw = _hw_params()

    # ---- weight prep (tiny parameter; one fused wrapper op) -----------------
    # Lane-dense expert dim (unmasked vst), transpose to (H, E_pad) so the
    # kernel contraction is plain A @ B, bf16 operand stream for the MXU.
    E_pad = _round_up(E, 128)
    w = weight
    if E_pad != E:
        w = jnp.pad(w, ((0, E_pad - E), (0, 0)))
    w = w.T.astype(jnp.bfloat16)                     # (H, E_pad)

    # ---- token tile ----------------------------------------------------------
    if tm is None:
        if hw["min_m_blocks"] > 1 and T >= 32:
            tm_target = pl.cdiv(T, hw["min_m_blocks"])   # feed both v7x cores
        else:
            tm_target = T                                # single TC: one block
        align = 128 if tm_target >= 128 else 16          # bf16 sublane packing
        tm = min(hw["tm_cap"], _round_up(max(tm_target, 16), align))
    if tm >= T:
        tm = T                                           # full-dim block is legal
    grid_m = pl.cdiv(T, tm)

    x_itemsize = jnp.dtype(hidden_states.dtype).itemsize

    # ---- K tile --------------------------------------------------------------
    if tk is None:
        tk = H                                           # full hidden dim (resident weight)

        def _vmem_bytes(tk_, kt_):
            x_b = 2 * tm * tk_ * x_itemsize              # double-buffered activations
            w_b = (1 if kt_ == 1 else 2) * tk_ * E_pad * 2
            o_b = 2 * tm * E_pad * 4
            return x_b + w_b + o_b

        while (_vmem_bytes(tk, pl.cdiv(H, tk)) > hw["vmem_budget"]
               and tk % 256 == 0 and tk > 512):
            tk //= 2
    assert tk == H or (H % tk == 0 and tk % 128 == 0), "tk must divide H (128-aligned)"
    kt = pl.cdiv(H, tk)

    grid = (grid_m, kt)

    cost = pl.CostEstimate(
        flops=2 * T * H * E_pad,
        transcendentals=0,
        bytes_accessed=T * H * x_itemsize + H * E_pad * 2 + T * E_pad * 4,
    )

    def _build(weight_pipeline_mode):
        w_kwargs = {}
        if weight_pipeline_mode is not None:
            w_kwargs["pipeline_mode"] = weight_pipeline_mode
        return pl.pallas_call(
            moe_gate_kernel,
            out_shape=jax.ShapeDtypeStruct((T, E_pad), jnp.float32),
            grid_spec=pltpu.PrefetchScalarGridSpec(
                num_scalar_prefetch=0,
                grid=grid,
                in_specs=[
                    # activations: rows follow i, K follows k (HBM dtype, no wrapper cast)
                    pl.BlockSpec((tm, tk), lambda i, k: (i, k)),
                    # weight: K follows k, full expert dim (resident when kt == 1)
                    pl.BlockSpec((tk, E_pad), lambda i, k: (k, 0), **w_kwargs),
                ],
                # same output block across the K axis -> accumulate in place
                out_specs=pl.BlockSpec((tm, E_pad), lambda i, k: (i, 0)),
            ),
            compiler_params=pltpu.CompilerParams(
                dimension_semantics=("parallel", "arbitrary"),
                vmem_limit_bytes=hw["vmem_limit"],
            ),
            cost_estimate=cost,
        )

    # Constant-index weight block never needs double buffering.
    weight_mode = pl.Buffered(1) if kt == 1 else None
    try:
        out = _build(weight_mode)(hidden_states, w)
    except Exception:
        if weight_mode is None:
            raise
        out = _build(None)(hidden_states, w)

    return out[:, :E]


if __name__ == "__main__":
    # Synthetic "config": n_routed_experts=128, hidden_size=256, topk_method='noaux_tc'
    n_routed_experts = 128
    hidden_size = 256
    num_tokens = 128

    key = jax.random.PRNGKey(0)
    kx, kw, kb = jax.random.split(key, 3)

    hidden_states = jax.random.normal(kx, (num_tokens, hidden_size), dtype=jnp.float32)
    # Deterministic parameter init (module's __init__ only gives shapes).
    weight = jax.random.normal(kw, (n_routed_experts, hidden_size), dtype=jnp.float32) * 0.02
    # Present in the module (topk_method == 'noaux_tc') but unused in forward().
    e_score_correction_bias = jax.random.normal(kb, (n_routed_experts,), dtype=jnp.float32) * 0.0

    logits = moe_gate_forward(hidden_states, weight)
    logits = jax.block_until_ready(logits)
    assert logits.shape == (num_tokens, n_routed_experts)
    assert logits.dtype == jnp.float32

    # Apples-to-apples reference: same bf16 operands, fp32 accumulation.
    ref_bf16 = jax.lax.dot_general(
        hidden_states.astype(jnp.bfloat16),
        weight.astype(jnp.bfloat16),
        dimension_numbers=(((1,), (1,)), ((), ())),
        preferred_element_type=jnp.float32,
    )
    assert jnp.allclose(logits, ref_bf16, atol=1e-3, rtol=1e-3)

    # Looser check against the pure fp32 F.linear reference (bf16 rounding only).
    ref_f32 = hidden_states @ weight.T
    assert jnp.allclose(logits, ref_f32, atol=5e-2, rtol=5e-2)

    print("KERNEL_OK")
</pallas_src>

<mosaic_0001>
module attributes {stable_mosaic.version = 11 : i64} {
  func.func @moe_gate_kernel(%arg0: i32, %arg1: i32, %arg2: memref<128x256xf32, #tpu.memory_space<vmem>>, %arg3: memref<256x128xbf16, #tpu.memory_space<vmem>>, %arg4: memref<128x128xf32, #tpu.memory_space<vmem>>) attributes {dimension_semantics = [#tpu.dimension_semantics<parallel>, #tpu.dimension_semantics<arbitrary>], iteration_bounds = array<i64: 1, 1>, scalar_prefetch = 0 : i64, scratch_operands = 0 : i64, tpu.core_type = #tpu.core_type<tc>, window_params = [{transform_indices = @transform_0, window_bounds = array<i64: 128, 256>}, {pipeline_mode = #tpu.pipeline_mode<synchronous>, transform_indices = @transform_1, window_bounds = array<i64: 256, 128>}, {transform_indices = @transform_2, window_bounds = array<i64: 128, 128>}]} {
    %c0 = arith.constant 0 : index
    %c0_0 = arith.constant 0 : index
    %0 = vector.load %arg2[%c0, %c0_0] : memref<128x256xf32, #tpu.memory_space<vmem>>, vector<128x256xf32>
    %1 = arith.truncf %0 : vector<128x256xf32> to vector<128x256xbf16>
    %c0_1 = arith.constant 0 : index
    %c0_2 = arith.constant 0 : index
    %2 = vector.load %arg3[%c0_1, %c0_2] : memref<256x128xbf16, #tpu.memory_space<vmem>>, vector<256x128xbf16>
    %cst = arith.constant dense<0.000000e+00> : vector<128x128xf32>
    %3 = tpu.matmul %1, %2, %cst {dimension_numbers = #tpu.dot_dimension_numbers<[1], [0], [0], [1], [0, 0, 1, 1], [], []>} : vector<128x256xbf16>, vector<256x128xbf16>, vector<128x128xf32> -> vector<128x128xf32>
    %c0_i32 = arith.constant 0 : i32
    %4 = arith.cmpi eq, %arg1, %c0_i32 : i32
    %5 = arith.extui %4 : i1 to i32
    %c0_i32_3 = arith.constant 0 : i32
    %6 = arith.cmpi ne, %5, %c0_i32_3 : i32
    scf.if %6 {
      %c0_6 = arith.constant 0 : index
      %c0_7 = arith.constant 0 : index
      %10 = vector.load %arg4[%c0_6, %c0_7] : memref<128x128xf32, #tpu.memory_space<vmem>>, vector<128x128xf32>
      tpu.vector_store %arg4[%c0_6, %c0_7], %3 {strides = array<i32>} : memref<128x128xf32, #tpu.memory_space<vmem>>, vector<128x128xf32>,
    } else {
    }
    %c0_i32_4 = arith.constant 0 : i32
    %7 = arith.cmpi ne, %arg1, %c0_i32_4 : i32
    %8 = arith.extui %7 : i1 to i32
    %c0_i32_5 = arith.constant 0 : i32
    %9 = arith.cmpi ne, %8, %c0_i32_5 : i32
    scf.if %9 {
      %c0_6 = arith.constant 0 : index
      %c0_7 = arith.constant 0 : index
      %10 = vector.load %arg4[%c0_6, %c0_7] : memref<128x128xf32, #tpu.memory_space<vmem>>, vector<128x128xf32>
      %11 = arith.addf %10, %3 : vector<128x128xf32>
      %c0_8 = arith.constant 0 : index
      %c0_9 = arith.constant 0 : index
      %12 = vector.load %arg4[%c0_8, %c0_9] : memref<128x128xf32, #tpu.memory_space<vmem>>, vector<128x128xf32>
      tpu.vector_store %arg4[%c0_8, %c0_9], %11 {strides = array<i32>} : memref<128x128xf32, #tpu.memory_space<vmem>>, vector<128x128xf32>,
    } else {
    }
    return
  }
  func.func @transform_0(%arg0: i32, %arg1: i32) -> (i32, i32) {
    %c0_i32 = arith.constant 0 : i32
    return %arg0, %arg1 : i32, i32
  }
  func.func @transform_1(%arg0: i32, %arg1: i32) -> (i32, i32) {
    %c0_i32 = arith.constant 0 : i32
    %c0_i32_0 = arith.constant 0 : i32
    return %arg1, %c0_i32 : i32, i32
  }
  func.func @transform_2(%arg0: i32, %arg1: i32) -> (i32, i32) {
    %c0_i32 = arith.constant 0 : i32
    %c0_i32_0 = arith.constant 0 : i32
    return %arg0, %c0_i32 : i32, i32
  }
}

module attributes {stable_mosaic.version = 11 : i64} {
  func.func @moe_gate_kernel(%arg0: i32, %arg1: i32, %arg2: memref<128x256xf32, #tpu.memory_space<vmem>>, %arg3: memref<256x128xbf16, #tpu.memory_space<vmem>>, %arg4: memref<128x128xf32, #tpu.memory_space<vmem>>) attributes {dimension_semantics = [#tpu.dimension_semantics<parallel>, #tpu.dimension_semantics<arbitrary>], iteration_bounds = array<i64: 1, 1>, scalar_prefetch = 0 : i64, scratch_operands = 0 : i64, tpu.core_type = #tpu.core_type<tc>, window_params = [{transform_indices = @transform_0, window_bounds = array<i64: 128, 256>}, {transform_indices = @transform_1, window_bounds = array<i64: 256, 128>}, {transform_indices = @transform_2, window_bounds = array<i64: 128, 128>}]} {
    %c0 = arith.constant 0 : index
    %c0_0 = arith.constant 0 : index
    %0 = vector.load %arg2[%c0, %c0_0] : memref<128x256xf32, #tpu.memory_space<vmem>>, vector<128x256xf32>
    %1 = arith.truncf %0 : vector<128x256xf32> to vector<128x256xbf16>
    %c0_1 = arith.constant 0 : index
    %c0_2 = arith.constant 0 : index
    %2 = vector.load %arg3[%c0_1, %c0_2] : memref<256x128xbf16, #tpu.memory_space<vmem>>, vector<256x128xbf16>
    %cst = arith.constant dense<0.000000e+00> : vector<128x128xf32>
    %3 = tpu.matmul %1, %2, %cst {dimension_numbers = #tpu.dot_dimension_numbers<[1], [0], [0], [1], [0, 0, 1, 1], [], []>} : vector<128x256xbf16>, vector<256x128xbf16>, vector<128x128xf32> -> vector<128x128xf32>
    %c0_i32 = arith.constant 0 : i32
    %4 = arith.cmpi eq, %arg1, %c0_i32 : i32
    %5 = arith.extui %4 : i1 to i32
    %c0_i32_3 = arith.constant 0 : i32
    %6 = arith.cmpi ne, %5, %c0_i32_3 : i32
    scf.if %6 {
      %c0_6 = arith.constant 0 : index
      %c0_7 = arith.constant 0 : index
      %10 = vector.load %arg4[%c0_6, %c0_7] : memref<128x128xf32, #tpu.memory_space<vmem>>, vector<128x128xf32>
      tpu.vector_store %arg4[%c0_6, %c0_7], %3 {strides = array<i32>} : memref<128x128xf32, #tpu.memory_space<vmem>>, vector<128x128xf32>,
    } else {
    }
    %c0_i32_4 = arith.constant 0 : i32
    %7 = arith.cmpi ne, %arg1, %c0_i32_4 : i32
    %8 = arith.extui %7 : i1 to i32
    %c0_i32_5 = arith.constant 0 : i32
    %9 = arith.cmpi ne, %8, %c0_i32_5 : i32
    scf.if %9 {
      %c0_6 = arith.constant 0 : index
      %c0_7 = arith.constant 0 : index
      %10 = vector.load %arg4[%c0_6, %c0_7] : memref<128x128xf32, #tpu.memory_space<vmem>>, vector<128x128xf32>
      %11 = arith.addf %10, %3 : vector<128x128xf32>
      %c0_8 = arith.constant 0 : index
      %c0_9 = arith.constant 0 : index
      %12 = vector.load %arg4[%c0_8, %c0_9] : memref<128x128xf32, #tpu.memory_space<vmem>>, vector<128x128xf32>
      tpu.vector_store %arg4[%c0_8, %c0_9], %11 {strides = array<i32>} : memref<128x128xf32, #tpu.memory_space<vmem>>, vector<128x128xf32>,
    } else {
    }
    return
  }
  func.func @transform_0(%arg0: i32, %arg1: i32) -> (i32, i32) {
    %c0_i32 = arith.constant 0 : i32
    return %arg0, %arg1 : i32, i32
  }
  func.func @transform_1(%arg0: i32, %arg1: i32) -> (i32, i32) {
    %c0_i32 = arith.constant 0 : i32
    %c0_i32_0 = arith.constant 0 : i32
    return %arg1, %c0_i32 : i32, i32
  }
  func.func @transform_2(%arg0: i32, %arg1: i32) -> (i32, i32) {
    %c0_i32 = arith.constant 0 : i32
    %c0_i32_0 = arith.constant 0 : i32
    return %arg0, %c0_i32 : i32, i32
  }
}

</mosaic_0001>

<llo_original>
// kernel: tpu_custom_call.1
$region0: #{tpu_custom_call.1}
  #allocation0 [shape = 'u32[]', space=smem, size = 0x4, offset = 0x4, fixed_abs, tag = 'smem constant byte address 0x4 - core index']
  #allocation1 [shape = 'u32[144,128]{1,0:T(1,128)}', space=vmem, size = 0x12000, scoped, tag = 'internal scratch']
  %s0 = inlined_call_operand.hbm [shape: f32[128,256], index: 0, kind: input, shape index: {}]
  %s1 = inlined_call_operand.hbm [shape: bf16[256,128], index: 1, kind: input, shape index: {}]
  %s2 = inlined_call_operand.hbm [shape: f32[128,128], index: 2, kind: output, shape index: {}]
  %s3 = sld [smem:[#allocation0]]
  $region34: #{tpu_custom_call.1} parent=0
    _
  %s5 = ssub.s32 1, %s3
  %s6 = scalar_select 0, %s5, %s3
  $region1: #{tpu_custom_call.1} parent=0
    #allocation2 [shape = 'u8[131072]{0}', space=vmem, size = 0x20000, scoped, tag = 'input window, operand 0, single buffered']
    #allocation3 [shape = 's32[1]{0}', space=sflag, size = 0x4, scoped, tag = 'scoped memory for tpu_custom_call.1']
    #allocation4 [shape = 's32[1]{0}', space=sflag, size = 0x4, scoped, tag = 'scoped memory for tpu_custom_call.1']
    #allocation5 [shape = 'u8[65536]{0}', space=vmem, size = 0x10000, scoped, tag = 'input window, operand 1, single buffered']
    #allocation6 [shape = 's32[1]{0}', space=sflag, size = 0x4, scoped, tag = 'scoped memory for tpu_custom_call.1']
    #allocation7 [shape = 'u8[65536]{0}', space=vmem, size = 0x10000, scoped, tag = 'output window, operand 0, single buffered']
    %7 = vsyncpa [#allocation3], 0
    %8 = vsyncpa [#allocation6], 0
    %9 = vsyncpa [#allocation4], 0
    // Predicated region
    $region2: #{tpu_custom_call.1} parent=1 // pred_check
      _
    $region3: #{tpu_custom_call.1} parent=1 // pred_check_branch
      %11 = sbr.rel (0) target = $region5
    $region4: #{tpu_custom_call.1} parent=1 // pred_region
      %s13 = ssub.s32 4096, 4096
      %14 = vsyncadd [#allocation3], %s13
      %s15 = sshll.u32 [#allocation2], 4
      %s16 = int_to_ptr.vmem [resolvable:$true] %s15
      %21 = dma.hbm_to_vmem [thread:$0]  %s0, 4096, %s16, [#allocation3], 256, 256, 16
    $region5: #{tpu_custom_call.1} parent=1 // pred_fallthru
      _
    // Predicated region
    $region6: #{tpu_custom_call.1} parent=1 // pred_check
      _
    $region7: #{tpu_custom_call.1} parent=1 // pred_check_branch
      %23 = sbr.rel (0) target = $region9
    $region8: #{tpu_custom_call.1} parent=1 // pred_region
      %s25 = ssub.s32 2048, 2048
      %26 = vsyncadd [#allocation6], %s25
      %s27 = sshll.u32 [#allocation5], 4
      %s28 = int_to_ptr.vmem [resolvable:$true] %s27
      %33 = dma.hbm_to_vmem [thread:$0]  %s1, 2048, %s28, [#allocation6], 64, 64, 4
    $region9: #{tpu_custom_call.1} parent=1 // pred_fallthru
      _
    // Predicated region
    $region10: #{tpu_custom_call.1} parent=1 // pred_check
      _
    $region11: #{tpu_custom_call.1} parent=1 // pred_check_branch
      %35 = sbr.rel (0) target = $region13
    $region12: #{tpu_custom_call.1} parent=1 // pred_region
      %36 = dma.done [#allocation3], 4096
    $region13: #{tpu_custom_call.1} parent=1 // pred_fallthru
      _
    // Predicated region
    $region14: #{tpu_custom_call.1} parent=1 // pred_check
      _
    $region15: #{tpu_custom_call.1} parent=1 // pred_check_branch
      %38 = sbr.rel (0) target = $region17
    $region16: #{tpu_custom_call.1} parent=1 // pred_region
      %39 = dma.done [#allocation6], 2048
    $region17: #{tpu_custom_call.1} parent=1 // pred_fallthru
      _
    %v41 = vld [vmem:[#allocation2] sm:$0xff]
    %v42 = vld [vmem:[#allocation2 + $0x8] sm:$0xff]
    %v43 = vld [vmem:[#allocation2 + $0x10] sm:$0xff]
    %v44 = vld [vmem:[#allocation2 + $0x18] sm:$0xff]
    %v45 = vld [vmem:[#allocation2 + $0x20] sm:$0xff]
    %v46 = vld [vmem:[#allocation2 + $0x28] sm:$0xff]
    %v47 = vld [vmem:[#allocation2 + $0x30] sm:$0xff]
    %v48 = vld [vmem:[#allocation2 + $0x38] sm:$0xff]
    %v49 = vld [vmem:[#allocation2 + $0x40] sm:$0xff]
    %v50 = vld [vmem:[#allocation2 + $0x48] sm:$0xff]
    %v51 = vld [vmem:[#allocation2 + $0x50] sm:$0xff]
    %v52 = vld [vmem:[#allocation2 + $0x58] sm:$0xff]
    %v53 = vld [vmem:[#allocation2 + $0x60] sm:$0xff]
    %v54 = vld [vmem:[#allocation2 + $0x68] sm:$0xff]
    %v55 = vld [vmem:[#allocation2 + $0x70] sm:$0xff]
    %v56 = vld [vmem:[#allocation2 + $0x78] sm:$0xff]
    %v57 = vld [vmem:[#allocation2 + $0x80] sm:$0xff]
    %v58 = vld [vmem:[#allocation2 + $0x88] sm:$0xff]
    %v59 = vld [vmem:[#allocation2 + $0x90] sm:$0xff]
    %v60 = vld [vmem:[#allocation2 + $0x98] sm:$0xff]
    %v61 = vld [vmem:[#allocation2 + $0xa0] sm:$0xff]
    %v62 = vld [vmem:[#allocation2 + $0xa8] sm:$0xff]
    %v63 = vld [vmem:[#allocation2 + $0xb0] sm:$0xff]
    %v64 = vld [vmem:[#allocation2 + $0xb8] sm:$0xff]
    %v65 = vld [vmem:[#allocation2 + $0xc0] sm:$0xff]
    %v66 = vld [vmem:[#allocation2 + $0xc8] sm:$0xff]
    %v67 = vld [vmem:[#allocation2 + $0xd0] sm:$0xff]
    %v68 = vld [vmem:[#allocation2 + $0xd8] sm:$0xff]
    %v69 = vld [vmem:[#allocation2 + $0xe0] sm:$0xff]
    %v70 = vld [vmem:[#allocation2 + $0xe8] sm:$0xff]
    %v71 = vld [vmem:[#allocation2 + $0xf0] sm:$0xff]
    %v72 = vld [vmem:[#allocation2 + $0xf8] sm:$0xff]
    %v73 = vpack.c.bf16 %v43, %v41
    %v74 = vpack.c.bf16 %v44, %v42
    %v75 = vpack.c.bf16 %v47, %v45
    %v76 = vpack.c.bf16 %v48, %v46
    %v77 = vpack.c.bf16 %v51, %v49
    %v78 = vpack.c.bf16 %v52, %v50
    %v79 = vpack.c.bf16 %v55, %v53
    %v80 = vpack.c.bf16 %v56, %v54
    %v81 = vpack.c.bf16 %v59, %v57
    %v82 = vpack.c.bf16 %v60, %v58
    %v83 = vpack.c.bf16 %v63, %v61
    %v84 = vpack.c.bf16 %v64, %v62
    %v85 = vpack.c.bf16 %v67, %v65
    %v86 = vpack.c.bf16 %v68, %v66
    %v87 = vpack.c.bf16 %v71, %v69
    %v88 = vpack.c.bf16 %v72, %v70
    %v89 = vld [vmem:[#allocation5] sm:$0xf]
    %v90 = vld [vmem:[#allocation5 + $0x4] sm:$0xf]
    %v91 = vld [vmem:[#allocation5 + $0x8] sm:$0xf]
    %v92 = vld [vmem:[#allocation5 + $0xc] sm:$0xf]
    %v93 = vld [vmem:[#allocation5 + $0x10] sm:$0xf]
    %v94 = vld [vmem:[#allocation5 + $0x14] sm:$0xf]
    %v95 = vld [vmem:[#allocation5 + $0x18] sm:$0xf]
    %v96 = vld [vmem:[#allocation5 + $0x1c] sm:$0xf]
    %v97 = vld [vmem:[#allocation5 + $0x20] sm:$0xf]
    %v98 = vld [vmem:[#allocation5 + $0x24] sm:$0xf]
    %v99 = vld [vmem:[#allocation5 + $0x28] sm:$0xf]
    %v100 = vld [vmem:[#allocation5 + $0x2c] sm:$0xf]
    %v101 = vld [vmem:[#allocation5 + $0x30] sm:$0xf]
    %v102 = vld [vmem:[#allocation5 + $0x34] sm:$0xf]
    %v103 = vld [vmem:[#allocation5 + $0x38] sm:$0xf]
    %v104 = vld [vmem:[#allocation5 + $0x3c] sm:$0xf]
    %v105 = vld [vmem:[#allocation5 + $0x40] sm:$0xf]
    %v106 = vld [vmem:[#allocation5 + $0x44] sm:$0xf]
    %v107 = vld [vmem:[#allocation5 + $0x48] sm:$0xf]
    %v108 = vld [vmem:[#allocation5 + $0x4c] sm:$0xf]
    %v109 = vld [vmem:[#allocation5 + $0x50] sm:$0xf]
    %v110 = vld [vmem:[#allocation5 + $0x54] sm:$0xf]
    %v111 = vld [vmem:[#allocation5 + $0x58] sm:$0xf]
    %v112 = vld [vmem:[#allocation5 + $0x5c] sm:$0xf]
    %v113 = vld [vmem:[#allocation5 + $0x60] sm:$0xf]
    %v114 = vld [vmem:[#allocation5 + $0x64] sm:$0xf]
    %v115 = vld [vmem:[#allocation5 + $0x68] sm:$0xf]
    %v116 = vld [vmem:[#allocation5 + $0x6c] sm:$0xf]
    %v117 = vld [vmem:[#allocation5 + $0x70] sm:$0xf]
    %v118 = vld [vmem:[#allocation5 + $0x74] sm:$0xf]
    %v119 = vld [vmem:[#allocation5 + $0x78] sm:$0xf]
    %v120 = vld [vmem:[#allocation5 + $0x7c] sm:$0xf]
    %v153 = vunpack.c.l.b16 %v89
    %v154 = vunpack.c.l.b16 %v90
    %v155 = vunpack.c.l.b16 %v91
    %v156 = vunpack.c.l.b16 %v92
    %v157 = vunpack.c.l.b16 %v93
    %v158 = vunpack.c.l.b16 %v94
    %v159 = vunpack.c.l.b16 %v95
    %v160 = vunpack.c.l.b16 %v96
    %v161 = vunpack.c.l.b16 %v97
    %v162 = vunpack.c.l.b16 %v98
    %v163 = vunpack.c.l.b16 %v99
    %v164 = vunpack.c.l.b16 %v100
    %v165 = vunpack.c.l.b16 %v101
    %v166 = vunpack.c.l.b16 %v102
    %v167 = vunpack.c.l.b16 %v103
    %v168 = vunpack.c.l.b16 %v104
    %v169 = vunpack.c.l.b16 %v105
    %v170 = vunpack.c.l.b16 %v106
    %v171 = vunpack.c.l.b16 %v107
    %v172 = vunpack.c.l.b16 %v108
    %v173 = vunpack.c.l.b16 %v109
    %v174 = vunpack.c.l.b16 %v110
    %v175 = vunpack.c.l.b16 %v111
    %v176 = vunpack.c.l.b16 %v112
    %v177 = vunpack.c.l.b16 %v113
    %v178 = vunpack.c.l.b16 %v114
    %v179 = vunpack.c.l.b16 %v115
    %v180 = vunpack.c.l.b16 %v116
    %v181 = vunpack.c.l.b16 %v117
    %v182 = vunpack.c.l.b16 %v118
    %v183 = vunpack.c.l.b16 %v119
    %v184 = vunpack.c.l.b16 %v120
    %v185 = vpack.c.b16 %v154, %v153
    %v186 = vpack.c.b16 %v156, %v155
    %v187 = vpack.c.b16 %v158, %v157
    %v188 = vpack.c.b16 %v160, %v159
    %v189 = vpack.c.b16 %v162, %v161
    %v190 = vpack.c.b16 %v164, %v163
    %v191 = vpack.c.b16 %v166, %v165
    %v192 = vpack.c.b16 %v168, %v167
    %v193 = vpack.c.b16 %v170, %v169
    %v194 = vpack.c.b16 %v172, %v171
    %v195 = vpack.c.b16 %v174, %v173
    %v196 = vpack.c.b16 %v176, %v175
    %v197 = vpack.c.b16 %v178, %v177
    %v198 = vpack.c.b16 %v180, %v179
    %v199 = vpack.c.b16 %v182, %v181
    %v200 = vpack.c.b16 %v184, %v183
    %217 = vmatprep.subr.bf16.mxu0 0
    %218 = vmatpush1.bf16.msra.mxu0 %v185
    %219 = vmatprep.subr.bf16.mxu0 0
    %220 = vmatpush1.bf16.msra.mxu0 %v186
    %221 = vmatprep.subr.bf16.mxu0 0
    %222 = vmatpush1.bf16.msra.mxu0 %v187
    %223 = vmatprep.subr.bf16.mxu0 0
    %224 = vmatpush1.bf16.msra.mxu0 %v188
    %225 = vmatprep.subr.bf16.mxu0 0
    %226 = vmatpush1.bf16.msra.mxu0 %v189
    %227 = vmatprep.subr.bf16.mxu0 0
    %228 = vmatpush1.bf16.msra.mxu0 %v190
    %229 = vmatprep.subr.bf16.mxu0 0
    %230 = vmatpush1.bf16.msra.mxu0 %v191
    %231 = vmatprep.subr.bf16.mxu0 0
    %232 = vmatpush1.bf16.msra.mxu0 %v192
    %233 = vmatprep.subr.bf16.mxu0 0
    %234 = vmatpush1.bf16.msra.mxu0 %v193
    %235 = vmatprep.subr.bf16.mxu0 0
    %236 = vmatpush1.bf16.msra.mxu0 %v194
    %237 = vmatprep.subr.bf16.mxu0 0
    %238 = vmatpush1.bf16.msra.mxu0 %v195
    %239 = vmatprep.subr.bf16.mxu0 0
    %240 = vmatpush1.bf16.msra.mxu0 %v196
    %241 = vmatprep.subr.bf16.mxu0 0
    %242 = vmatpush1.bf16.msra.mxu0 %v197
    %243 = vmatprep.subr.bf16.mxu0 0
    %244 = vmatpush1.bf16.msra.mxu0 %v198
    %245 = vmatprep.subr.bf16.mxu0 0
    %246 = vmatpush1.bf16.msra.mxu0 %v199
    %247 = vmatprep.subr.bf16.mxu0 0
    %248 = vmatpush1.bf16.msra.mxu0 %v200
    %249 = vmatprep.mubr.bf16.mxu0 %v74
    %250 = vmatmul.mubr.bf16.gmra.mrb[0].mxu0 %v73
    %v251 = vpop.f32.mrb[0].mxu0
    %v252 = vadd.f32 0.0, %v251
    %v253 = vpop.f32.mrb[0].mxu0
    %v254 = vpop.f32.mrb[0].mxu0
    %v255 = vadd.f32 0.0, %v254
    %v256 = vpop.f32.mrb[0].mxu0
    %257 = vmatprep.mubr.bf16.mxu0 %v76
    %258 = vmatmul.mubr.bf16.gmra.mrb[0].mxu0 %v75
    %v259 = vpop.f32.mrb[0].mxu0
    %v260 = vadd.f32 0.0, %v259
    %v261 = vpop.f32.mrb[0].mxu0
    %v262 = vpop.f32.mrb[0].mxu0
    %v263 = vadd.f32 0.0, %v262
    %v264 = vpop.f32.mrb[0].mxu0
    %265 = vmatprep.mubr.bf16.mxu0 %v78
    %266 = vmatmul.mubr.bf16.gmra.mrb[0].mxu0 %v77
    %v267 = vpop.f32.mrb[0].mxu0
    %v268 = vadd.f32 0.0, %v267
    %v269 = vpop.f32.mrb[0].mxu0
    %v270 = vpop.f32.mrb[0].mxu0
    %v271 = vadd.f32 0.0, %v270
    %v272 = vpop.f32.mrb[0].mxu0
    %273 = vmatprep.mubr.bf16.mxu0 %v80
    %274 = vmatmul.mubr.bf16.gmra.mrb[0].mxu0 %v79
    %v275 = vpop.f32.mrb[0].mxu0
    %v276 = vadd.f32 0.0, %v275
    %v277 = vpop.f32.mrb[0].mxu0
    %v278 = vpop.f32.mrb[0].mxu0
    %v279 = vadd.f32 0.0, %v278
    %v280 = vpop.f32.mrb[0].mxu0
    %281 = vmatprep.mubr.bf16.mxu0 %v82
    %282 = vmatmul.mubr.bf16.gmra.mrb[0].mxu0 %v81
    %v283 = vpop.f32.mrb[0].mxu0
    %v284 = vadd.f32 0.0, %v283
    %v285 = vpop.f32.mrb[0].mxu0
    %v286 = vpop.f32.mrb[0].mxu0
    %v287 = vadd.f32 0.0, %v286
    %v288 = vpop.f32.mrb[0].mxu0
    %289 = vmatprep.mubr.bf16.mxu0 %v84
    %290 = vmatmul.mubr.bf16.gmra.mrb[0].mxu0 %v83
    %v291 = vpop.f32.mrb[0].mxu0
    %v292 = vadd.f32 0.0, %v291
    %v293 = vpop.f32.mrb[0].mxu0
    %v294 = vpop.f32.mrb[0].mxu0
    %v295 = vadd.f32 0.0, %v294
    %v296 = vpop.f32.mrb[0].mxu0
    %297 = vmatprep.mubr.bf16.mxu0 %v86
    %298 = vmatmul.mubr.bf16.gmra.mrb[0].mxu0 %v85
    %v299 = vpop.f32.mrb[0].mxu0
    %v300 = vadd.f32 0.0, %v299
    %v301 = vpop.f32.mrb[0].mxu0
    %v302 = vpop.f32.mrb[0].mxu0
    %v303 = vadd.f32 0.0, %v302
    %v304 = vpop.f32.mrb[0].mxu0
    %305 = vmatprep.mubr.bf16.mxu0 %v88
    %306 = vmatmul.mubr.bf16.gmra.mrb[0].mxu0 %v87
    %v307 = vpop.f32.mrb[0].mxu0
    %v308 = vadd.f32 0.0, %v307
    %v309 = vpop.f32.mrb[0].mxu0
    %v310 = vpop.f32.mrb[0].mxu0
    %v311 = vadd.f32 0.0, %v310
    %v312 = vpop.f32.mrb[0].mxu0
    %313 = vdwg.mxu0
    %p314 = scmp.eq.s32.totalorder 0, 0
    // Predicated region
    $region18: #{tpu_custom_call.1} parent=1 // pred_check
      %p315 = pneg %p314
    $region19: #{tpu_custom_call.1} parent=1 // pred_check_branch
      %317 = sbr.rel (%p315) target = $region21
    $region20: #{tpu_custom_call.1} parent=1 // pred_region
      %318 = vst [vmem:[#allocation7] sm:$0xff] %v252
      %319 = vst [vmem:[#allocation7 + $0x8] sm:$0xff] %v255
      %320 = vst [vmem:[#allocation7 + $0x10] sm:$0xff] %v260
      %321 = vst [vmem:[#allocation7 + $0x18] sm:$0xff] %v263
      %322 = vst [vmem:[#allocation7 + $0x20] sm:$0xff] %v268
      %323 = vst [vmem:[#allocation7 + $0x28] sm:$0xff] %v271
      %324 = vst [vmem:[#allocation7 + $0x30] sm:$0xff] %v276
      %325 = vst [vmem:[#allocation7 + $0x38] sm:$0xff] %v279
      %326 = vst [vmem:[#allocation7 + $0x40] sm:$0xff] %v284
      %327 = vst [vmem:[#allocation7 + $0x48] sm:$0xff] %v287
      %328 = vst [vmem:[#allocation7 + $0x50] sm:$0xff] %v292
      %329 = vst [vmem:[#allocation7 + $0x58] sm:$0xff] %v295
      %330 = vst [vmem:[#allocation7 + $0x60] sm:$0xff] %v300
      %331 = vst [vmem:[#allocation7 + $0x68] sm:$0xff] %v303
      %332 = vst [vmem:[#allocation7 + $0x70] sm:$0xff] %v308
      %333 = vst [vmem:[#allocation7 + $0x78] sm:$0xff] %v311
    $region21: #{tpu_custom_call.1} parent=1 // pred_fallthru
      _
    %p334 = scmp.ne.s32.totalorder 0, 0
    // Predicated region
    $region22: #{tpu_custom_call.1} parent=1 // pred_check
      %p335 = pneg %p334
    $region23: #{tpu_custom_call.1} parent=1 // pred_check_branch
      %337 = sbr.rel (%p335) target = $region25
    $region24: #{tpu_custom_call.1} parent=1 // pred_region
      %v338 = vld [vmem:[#allocation7] sm:$0xff]
      %v339 = vld [vmem:[#allocation7 + $0x8] sm:$0xff]
      %v340 = vld [vmem:[#allocation7 + $0x10] sm:$0xff]
      %v341 = vld [vmem:[#allocation7 + $0x18] sm:$0xff]
      %v342 = vld [vmem:[#allocation7 + $0x20] sm:$0xff]
      %v343 = vld [vmem:[#allocation7 + $0x28] sm:$0xff]
      %v344 = vld [vmem:[#allocation7 + $0x30] sm:$0xff]
      %v345 = vld [vmem:[#allocation7 + $0x38] sm:$0xff]
      %v346 = vld [vmem:[#allocation7 + $0x40] sm:$0xff]
      %v347 = vld [vmem:[#allocation7 + $0x48] sm:$0xff]
      %v348 = vld [vmem:[#allocation7 + $0x50] sm:$0xff]
      %v349 = vld [vmem:[#allocation7 + $0x58] sm:$0xff]
      %v350 = vld [vmem:[#allocation7 + $0x60] sm:$0xff]
      %v351 = vld [vmem:[#allocation7 + $0x68] sm:$0xff]
      %v352 = vld [vmem:[#allocation7 + $0x70] sm:$0xff]
      %v353 = vld [vmem:[#allocation7 + $0x78] sm:$0xff]
      %v354 = vadd.f32 %v338, %v252
      %v355 = vadd.f32 %v339, %v255
      %v356 = vadd.f32 %v340, %v260
      %v357 = vadd.f32 %v341, %v263
      %v358 = vadd.f32 %v342, %v268
      %v359 = vadd.f32 %v343, %v271
      %v360 = vadd.f32 %v344, %v276
      %v361 = vadd.f32 %v345, %v279
      %v362 = vadd.f32 %v346, %v284
      %v363 = vadd.f32 %v347, %v287
      %v364 = vadd.f32 %v348, %v292
      %v365 = vadd.f32 %v349, %v295
      %v366 = vadd.f32 %v350, %v300
      %v367 = vadd.f32 %v351, %v303
      %v368 = vadd.f32 %v352, %v308
      %v369 = vadd.f32 %v353, %v311
      %370 = vst [vmem:[#allocation7] sm:$0xff] %v354
      %371 = vst [vmem:[#allocation7 + $0x8] sm:$0xff] %v355
      %372 = vst [vmem:[#allocation7 + $0x10] sm:$0xff] %v356
      %373 = vst [vmem:[#allocation7 + $0x18] sm:$0xff] %v357
      %374 = vst [vmem:[#allocation7 + $0x20] sm:$0xff] %v358
      %375 = vst [vmem:[#allocation7 + $0x28] sm:$0xff] %v359
      %376 = vst [vmem:[#allocation7 + $0x30] sm:$0xff] %v360
      %377 = vst [vmem:[#allocation7 + $0x38] sm:$0xff] %v361
      %378 = vst [vmem:[#allocation7 + $0x40] sm:$0xff] %v362
      %379 = vst [vmem:[#allocation7 + $0x48] sm:$0xff] %v363
      %380 = vst [vmem:[#allocation7 + $0x50] sm:$0xff] %v364
      %381 = vst [vmem:[#allocation7 + $0x58] sm:$0xff] %v365
      %382 = vst [vmem:[#allocation7 + $0x60] sm:$0xff] %v366
      %383 = vst [vmem:[#allocation7 + $0x68] sm:$0xff] %v367
      %384 = vst [vmem:[#allocation7 + $0x70] sm:$0xff] %v368
      %385 = vst [vmem:[#allocation7 + $0x78] sm:$0xff] %v369
    $region25: #{tpu_custom_call.1} parent=1 // pred_fallthru
      _
    // Predicated region
    $region26: #{tpu_custom_call.1} parent=1 // pred_check
      _
    $region27: #{tpu_custom_call.1} parent=1 // pred_check_branch
      %387 = sbr.rel (0) target = $region29
    $region28: #{tpu_custom_call.1} parent=1 // pred_region
      %s389 = ssub.s32 2048, 2048
      %390 = vsyncadd [#allocation4], %s389
      %s391 = sshll.u32 [#allocation7], 4
      %s392 = int_to_ptr.vmem [resolvable:$true] %s391
      %397 = dma.vmem_to_hbm [thread:$0]  %s392, 2048, %s2, [#allocation4], 128, 128, 8
    $region29: #{tpu_custom_call.1} parent=1 // pred_fallthru
      _
    // Predicated region
    $region30: #{tpu_custom_call.1} parent=1 // pred_check
      _
    $region31: #{tpu_custom_call.1} parent=1 // pred_check_branch
      %399 = sbr.rel (0) target = $region33
    $region32: #{tpu_custom_call.1} parent=1 // pred_region
      %400 = dma.done [#allocation4], 2048
    $region33: #{tpu_custom_call.1} parent=1 // pred_fallthru
      _
    %401 = vsyncpa [#allocation3], 1
    %402 = vsyncpa [#allocation6], 1
    %403 = vsyncpa [#allocation4], 1

// kernel: tpu_custom_call.1
$region0: #{tpu_custom_call.1}
  #allocation0 [shape = 'u32[]', space=smem, size = 0x4, offset = 0x4, fixed_abs, tag = 'smem constant byte address 0x4 - core index']
  #allocation1 [shape = 'u32[144,128]{1,0:T(1,128)}', space=vmem, size = 0x12000, scoped, tag = 'internal scratch']
  %s0 = inlined_call_operand.hbm [shape: f32[128,256], index: 0, kind: input, shape index: {}]
  %s1 = inlined_call_operand.hbm [shape: bf16[256,128], index: 1, kind: input, shape index: {}]
  %s2 = inlined_call_operand.hbm [shape: f32[128,128], index: 2, kind: output, shape index: {}]
  %s3 = sld [smem:[#allocation0]]
  $region34: #{tpu_custom_call.1} parent=0
    _
  %s5 = ssub.s32 1, %s3
  %s6 = scalar_select 0, %s5, %s3
  $region1: #{tpu_custom_call.1} parent=0
    #allocation2 [shape = 'u8[131072]{0}', space=vmem, size = 0x20000, scoped, tag = 'input window, operand 0, single buffered']
    #allocation3 [shape = 's32[1]{0}', space=sflag, size = 0x4, scoped, tag = 'scoped memory for tpu_custom_call.1']
    #allocation4 [shape = 's32[1]{0}', space=sflag, size = 0x4, scoped, tag = 'scoped memory for tpu_custom_call.1']
    #allocation5 [shape = 'u8[65536]{0}', space=vmem, size = 0x10000, scoped, tag = 'input window, operand 1, single buffered']
    #allocation6 [shape = 's32[1]{0}', space=sflag, size = 0x4, scoped, tag = 'scoped memory for tpu_custom_call.1']
    #allocation7 [shape = 'u8[65536]{0}', space=vmem, size = 0x10000, scoped, tag = 'output window, operand 0, single buffered']
    %7 = vsyncpa [#allocation3], 0
    %8 = vsyncpa [#allocation6], 0
    %9 = vsyncpa [#allocation4], 0
    // Predicated region
    $region2: #{tpu_custom_call.1} parent=1 // pred_check
      _
    $region3: #{tpu_custom_call.1} parent=1 // pred_check_branch
      %11 = sbr.rel (0) target = $region5
    $region4: #{tpu_custom_call.1} parent=1 // pred_region
      %s13 = ssub.s32 4096, 4096
      %14 = vsyncadd [#allocation3], %s13
      %s15 = sshll.u32 [#allocation2], 4
      %s16 = int_to_ptr.vmem [resolvable:$true] %s15
      %21 = dma.hbm_to_vmem [thread:$0]  %s0, 4096, %s16, [#allocation3], 256, 256, 16
    $region5: #{tpu_custom_call.1} parent=1 // pred_fallthru
      _
    // Predicated region
    $region6: #{tpu_custom_call.1} parent=1 // pred_check
      _
    $region7: #{tpu_custom_call.1} parent=1 // pred_check_branch
      %23 = sbr.rel (0) target = $region9
    $region8: #{tpu_custom_call.1} parent=1 // pred_region
      %s25 = ssub.s32 2048, 2048
      %26 = vsyncadd [#allocation6], %s25
      %s27 = sshll.u32 [#allocation5], 4
      %s28 = int_to_ptr.vmem [resolvable:$true] %s27
      %33 = dma.hbm_to_vmem [thread:$0]  %s1, 2048, %s28, [#allocation6], 64, 64, 4
    $region9: #{tpu_custom_call.1} parent=1 // pred_fallthru
      _
    // Predicated region
    $region10: #{tpu_custom_call.1} parent=1 // pred_check
      _
    $region11: #{tpu_custom_call.1} parent=1 // pred_check_branch
      %35 = sbr.rel (0) target = $region13
    $region12: #{tpu_custom_call.1} parent=1 // pred_region
      %36 = dma.done [#allocation3], 4096
    $region13: #{tpu_custom_call.1} parent=1 // pred_fallthru
      _
    // Predicated region
    $region14: #{tpu_custom_call.1} parent=1 // pred_check
      _
    $region15: #{tpu_custom_call.1} parent=1 // pred_check_branch
      %38 = sbr.rel (0) target = $region17
    $region16: #{tpu_custom_call.1} parent=1 // pred_region
      %39 = dma.done [#allocation6], 2048
    $region17: #{tpu_custom_call.1} parent=1 // pred_fallthru
      _
    %v41 = vld [vmem:[#allocation2] sm:$0xff]
    %v42 = vld [vmem:[#allocation2 + $0x8] sm:$0xff]
    %v43 = vld [vmem:[#allocation2 + $0x10] sm:$0xff]
    %v44 = vld [vmem:[#allocation2 + $0x18] sm:$0xff]
    %v45 = vld [vmem:[#allocation2 + $0x20] sm:$0xff]
    %v46 = vld [vmem:[#allocation2 + $0x28] sm:$0xff]
    %v47 = vld [vmem:[#allocation2 + $0x30] sm:$0xff]
    %v48 = vld [vmem:[#allocation2 + $0x38] sm:$0xff]
    %v49 = vld [vmem:[#allocation2 + $0x40] sm:$0xff]
    %v50 = vld [vmem:[#allocation2 + $0x48] sm:$0xff]
    %v51 = vld [vmem:[#allocation2 + $0x50] sm:$0xff]
    %v52 = vld [vmem:[#allocation2 + $0x58] sm:$0xff]
    %v53 = vld [vmem:[#allocation2 + $0x60] sm:$0xff]
    %v54 = vld [vmem:[#allocation2 + $0x68] sm:$0xff]
    %v55 = vld [vmem:[#allocation2 + $0x70] sm:$0xff]
    %v56 = vld [vmem:[#allocation2 + $0x78] sm:$0xff]
    %v57 = vld [vmem:[#allocation2 + $0x80] sm:$0xff]
    %v58 = vld [vmem:[#allocation2 + $0x88] sm:$0xff]
    %v59 = vld [vmem:[#allocation2 + $0x90] sm:$0xff]
    %v60 = vld [vmem:[#allocation2 + $0x98] sm:$0xff]
    %v61 = vld [vmem:[#allocation2 + $0xa0] sm:$0xff]
    %v62 = vld [vmem:[#allocation2 + $0xa8] sm:$0xff]
    %v63 = vld [vmem:[#allocation2 + $0xb0] sm:$0xff]
    %v64 = vld [vmem:[#allocation2 + $0xb8] sm:$0xff]
    %v65 = vld [vmem:[#allocation2 + $0xc0] sm:$0xff]
    %v66 = vld [vmem:[#allocation2 + $0xc8] sm:$0xff]
    %v67 = vld [vmem:[#allocation2 + $0xd0] sm:$0xff]
    %v68 = vld [vmem:[#allocation2 + $0xd8] sm:$0xff]
    %v69 = vld [vmem:[#allocation2 + $0xe0] sm:$0xff]
    %v70 = vld [vmem:[#allocation2 + $0xe8] sm:$0xff]
    %v71 = vld [vmem:[#allocation2 + $0xf0] sm:$0xff]
    %v72 = vld [vmem:[#allocation2 + $0xf8] sm:$0xff]
    %v73 = vpack.c.bf16 %v43, %v41
    %v74 = vpack.c.bf16 %v44, %v42
    %v75 = vpack.c.bf16 %v47, %v45
    %v76 = vpack.c.bf16 %v48, %v46
    %v77 = vpack.c.bf16 %v51, %v49
    %v78 = vpack.c.bf16 %v52, %v50
    %v79 = vpack.c.bf16 %v55, %v53
    %v80 = vpack.c.bf16 %v56, %v54
    %v81 = vpack.c.bf16 %v59, %v57
    %v82 = vpack.c.bf16 %v60, %v58
    %v83 = vpack.c.bf16 %v63, %v61
    %v84 = vpack.c.bf16 %v64, %v62
    %v85 = vpack.c.bf16 %v67, %v65
    %v86 = vpack.c.bf16 %v68, %v66
    %v87 = vpack.c.bf16 %v71, %v69
    %v88 = vpack.c.bf16 %v72, %v70
    %v89 = vld [vmem:[#allocation5] sm:$0xf]
    %v90 = vld [vmem:[#allocation5 + $0x4] sm:$0xf]
    %v91 = vld [vmem:[#allocation5 + $0x8] sm:$0xf]
    %v92 = vld [vmem:[#allocation5 + $0xc] sm:$0xf]
    %v93 = vld [vmem:[#allocation5 + $0x10] sm:$0xf]
    %v94 = vld [vmem:[#allocation5 + $0x14] sm:$0xf]
    %v95 = vld [vmem:[#allocation5 + $0x18] sm:$0xf]
    %v96 = vld [vmem:[#allocation5 + $0x1c] sm:$0xf]
    %v97 = vld [vmem:[#allocation5 + $0x20] sm:$0xf]
    %v98 = vld [vmem:[#allocation5 + $0x24] sm:$0xf]
    %v99 = vld [vmem:[#allocation5 + $0x28] sm:$0xf]
    %v100 = vld [vmem:[#allocation5 + $0x2c] sm:$0xf]
    %v101 = vld [vmem:[#allocation5 + $0x30] sm:$0xf]
    %v102 = vld [vmem:[#allocation5 + $0x34] sm:$0xf]
    %v103 = vld [vmem:[#allocation5 + $0x38] sm:$0xf]
    %v104 = vld [vmem:[#allocation5 + $0x3c] sm:$0xf]
    %v105 = vld [vmem:[#allocation5 + $0x40] sm:$0xf]
    %v106 = vld [vmem:[#allocation5 + $0x44] sm:$0xf]
    %v107 = vld [vmem:[#allocation5 + $0x48] sm:$0xf]
    %v108 = vld [vmem:[#allocation5 + $0x4c] sm:$0xf]
    %v109 = vld [vmem:[#allocation5 + $0x50] sm:$0xf]
    %v110 = vld [vmem:[#allocation5 + $0x54] sm:$0xf]
    %v111 = vld [vmem:[#allocation5 + $0x58] sm:$0xf]
    %v112 = vld [vmem:[#allocation5 + $0x5c] sm:$0xf]
    %v113 = vld [vmem:[#allocation5 + $0x60] sm:$0xf]
    %v114 = vld [vmem:[#allocation5 + $0x64] sm:$0xf]
    %v115 = vld [vmem:[#allocation5 + $0x68] sm:$0xf]
    %v116 = vld [vmem:[#allocation5 + $0x6c] sm:$0xf]
    %v117 = vld [vmem:[#allocation5 + $0x70] sm:$0xf]
    %v118 = vld [vmem:[#allocation5 + $0x74] sm:$0xf]
    %v119 = vld [vmem:[#allocation5 + $0x78] sm:$0xf]
    %v120 = vld [vmem:[#allocation5 + $0x7c] sm:$0xf]
    %v153 = vunpack.c.l.b16 %v89
    %v154 = vunpack.c.l.b16 %v90
    %v155 = vunpack.c.l.b16 %v91
    %v156 = vunpack.c.l.b16 %v92
    %v157 = vunpack.c.l.b16 %v93
    %v158 = vunpack.c.l.b16 %v94
    %v159 = vunpack.c.l.b16 %v95
    %v160 = vunpack.c.l.b16 %v96
    %v161 = vunpack.c.l.b16 %v97
    %v162 = vunpack.c.l.b16 %v98
    %v163 = vunpack.c.l.b16 %v99
    %v164 = vunpack.c.l.b16 %v100
    %v165 = vunpack.c.l.b16 %v101
    %v166 = vunpack.c.l.b16 %v102
    %v167 = vunpack.c.l.b16 %v103
    %v168 = vunpack.c.l.b16 %v104
    %v169 = vunpack.c.l.b16 %v105
    %v170 = vunpack.c.l.b16 %v106
    %v171 = vunpack.c.l.b16 %v107
    %v172 = vunpack.c.l.b16 %v108
    %v173 = vunpack.c.l.b16 %v109
    %v174 = vunpack.c.l.b16 %v110
    %v175 = vunpack.c.l.b16 %v111
    %v176 = vunpack.c.l.b16 %v112
    %v177 = vunpack.c.l.b16 %v113
    %v178 = vunpack.c.l.b16 %v114
    %v179 = vunpack.c.l.b16 %v115
    %v180 = vunpack.c.l.b16 %v116
    %v181 = vunpack.c.l.b16 %v117
    %v182 = vunpack.c.l.b16 %v118
    %v183 = vunpack.c.l.b16 %v119
    %v184 = vunpack.c.l.b16 %v120
    %v185 = vpack.c.b16 %v154, %v153
    %v186 = vpack.c.b16 %v156, %v155
    %v187 = vpack.c.b16 %v158, %v157
    %v188 = vpack.c.b16 %v160, %v159
    %v189 = vpack.c.b16 %v162, %v161
    %v190 = vpack.c.b16 %v164, %v163
    %v191 = vpack.c.b16 %v166, %v165
    %v192 = vpack.c.b16 %v168, %v167
    %v193 = vpack.c.b16 %v170, %v169
    %v194 = vpack.c.b16 %v172, %v171
    %v195 = vpack.c.b16 %v174, %v173
    %v196 = vpack.c.b16 %v176, %v175
    %v197 = vpack.c.b16 %v178, %v177
    %v198 = vpack.c.b16 %v180, %v179
    %v199 = vpack.c.b16 %v182, %v181
    %v200 = vpack.c.b16 %v184, %v183
    %217 = vmatprep.subr.bf16.mxu0 0
    %218 = vmatpush1.bf16.msra.mxu0 %v185
    %219 = vmatprep.subr.bf16.mxu0 0
    %220 = vmatpush1.bf16.msra.mxu0 %v186
    %221 = vmatprep.subr.bf16.mxu0 0
    %222 = vmatpush1.bf16.msra.mxu0 %v187
    %223 = vmatprep.subr.bf16.mxu0 0
    %224 = vmatpush1.bf16.msra.mxu0 %v188
    %225 = vmatprep.subr.bf16.mxu0 0
    %226 = vmatpush1.bf16.msra.mxu0 %v189
    %227 = vmatprep.subr.bf16.mxu0 0
    %228 = vmatpush1.bf16.msra.mxu0 %v190
    %229 = vmatprep.subr.bf16.mxu0 0
    %230 = vmatpush1.bf16.msra.mxu0 %v191
    %231 = vmatprep.subr.bf16.mxu0 0
    %232 = vmatpush1.bf16.msra.mxu0 %v192
    %233 = vmatprep.subr.bf16.mxu0 0
    %234 = vmatpush1.bf16.msra.mxu0 %v193
    %235 = vmatprep.subr.bf16.mxu0 0
    %236 = vmatpush1.bf16.msra.mxu0 %v194
    %237 = vmatprep.subr.bf16.mxu0 0
    %238 = vmatpush1.bf16.msra.mxu0 %v195
    %239 = vmatprep.subr.bf16.mxu0 0
    %240 = vmatpush1.bf16.msra.mxu0 %v196
    %241 = vmatprep.subr.bf16.mxu0 0
    %242 = vmatpush1.bf16.msra.mxu0 %v197
    %243 = vmatprep.subr.bf16.mxu0 0
    %244 = vmatpush1.bf16.msra.mxu0 %v198
    %245 = vmatprep.subr.bf16.mxu0 0
    %246 = vmatpush1.bf16.msra.mxu0 %v199
    %247 = vmatprep.subr.bf16.mxu0 0
    %248 = vmatpush1.bf16.msra.mxu0 %v200
    %249 = vmatprep.mubr.bf16.mxu0 %v74
    %250 = vmatmul.mubr.bf16.gmra.mrb[0].mxu0 %v73
    %v251 = vpop.f32.mrb[0].mxu0
    %v252 = vadd.f32 0.0, %v251
    %v253 = vpop.f32.mrb[0].mxu0
    %v254 = vpop.f32.mrb[0].mxu0
    %v255 = vadd.f32 0.0, %v254
    %v256 = vpop.f32.mrb[0].mxu0
    %257 = vmatprep.mubr.bf16.mxu0 %v76
    %258 = vmatmul.mubr.bf16.gmra.mrb[0].mxu0 %v75
    %v259 = vpop.f32.mrb[0].mxu0
    %v260 = vadd.f32 0.0, %v259
    %v261 = vpop.f32.mrb[0].mxu0
    %v262 = vpop.f32.mrb[0].mxu0
    %v263 = vadd.f32 0.0, %v262
    %v264 = vpop.f32.mrb[0].mxu0
    %265 = vmatprep.mubr.bf16.mxu0 %v78
    %266 = vmatmul.mubr.bf16.gmra.mrb[0].mxu0 %v77
    %v267 = vpop.f32.mrb[0].mxu0
    %v268 = vadd.f32 0.0, %v267
    %v269 = vpop.f32.mrb[0].mxu0
    %v270 = vpop.f32.mrb[0].mxu0
    %v271 = vadd.f32 0.0, %v270
    %v272 = vpop.f32.mrb[0].mxu0
    %273 = vmatprep.mubr.bf16.mxu0 %v80
    %274 = vmatmul.mubr.bf16.gmra.mrb[0].mxu0 %v79
    %v275 = vpop.f32.mrb[0].mxu0
    %v276 = vadd.f32 0.0, %v275
    %v277 = vpop.f32.mrb[0].mxu0
    %v278 = vpop.f32.mrb[0].mxu0
    %v279 = vadd.f32 0.0, %v278
    %v280 = vpop.f32.mrb[0].mxu0
    %281 = vmatprep.mubr.bf16.mxu0 %v82
    %282 = vmatmul.mubr.bf16.gmra.mrb[0].mxu0 %v81
    %v283 = vpop.f32.mrb[0].mxu0
    %v284 = vadd.f32 0.0, %v283
    %v285 = vpop.f32.mrb[0].mxu0
    %v286 = vpop.f32.mrb[0].mxu0
    %v287 = vadd.f32 0.0, %v286
    %v288 = vpop.f32.mrb[0].mxu0
    %289 = vmatprep.mubr.bf16.mxu0 %v84
    %290 = vmatmul.mubr.bf16.gmra.mrb[0].mxu0 %v83
    %v291 = vpop.f32.mrb[0].mxu0
    %v292 = vadd.f32 0.0, %v291
    %v293 = vpop.f32.mrb[0].mxu0
    %v294 = vpop.f32.mrb[0].mxu0
    %v295 = vadd.f32 0.0, %v294
    %v296 = vpop.f32.mrb[0].mxu0
    %297 = vmatprep.mubr.bf16.mxu0 %v86
    %298 = vmatmul.mubr.bf16.gmra.mrb[0].mxu0 %v85
    %v299 = vpop.f32.mrb[0].mxu0
    %v300 = vadd.f32 0.0, %v299
    %v301 = vpop.f32.mrb[0].mxu0
    %v302 = vpop.f32.mrb[0].mxu0
    %v303 = vadd.f32 0.0, %v302
    %v304 = vpop.f32.mrb[0].mxu0
    %305 = vmatprep.mubr.bf16.mxu0 %v88
    %306 = vmatmul.mubr.bf16.gmra.mrb[0].mxu0 %v87
    %v307 = vpop.f32.mrb[0].mxu0
    %v308 = vadd.f32 0.0, %v307
    %v309 = vpop.f32.mrb[0].mxu0
    %v310 = vpop.f32.mrb[0].mxu0
    %v311 = vadd.f32 0.0, %v310
    %v312 = vpop.f32.mrb[0].mxu0
    %313 = vdwg.mxu0
    %p314 = scmp.eq.s32.totalorder 0, 0
    // Predicated region
    $region18: #{tpu_custom_call.1} parent=1 // pred_check
      %p315 = pneg %p314
    $region19: #{tpu_custom_call.1} parent=1 // pred_check_branch
      %317 = sbr.rel (%p315) target = $region21
    $region20: #{tpu_custom_call.1} parent=1 // pred_region
      %318 = vst [vmem:[#allocation7] sm:$0xff] %v252
      %319 = vst [vmem:[#allocation7 + $0x8] sm:$0xff] %v255
      %320 = vst [vmem:[#allocation7 + $0x10] sm:$0xff] %v260
      %321 = vst [vmem:[#allocation7 + $0x18] sm:$0xff] %v263
      %322 = vst [vmem:[#allocation7 + $0x20] sm:$0xff] %v268
      %323 = vst [vmem:[#allocation7 + $0x28] sm:$0xff] %v271
      %324 = vst [vmem:[#allocation7 + $0x30] sm:$0xff] %v276
      %325 = vst [vmem:[#allocation7 + $0x38] sm:$0xff] %v279
      %326 = vst [vmem:[#allocation7 + $0x40] sm:$0xff] %v284
      %327 = vst [vmem:[#allocation7 + $0x48] sm:$0xff] %v287
      %328 = vst [vmem:[#allocation7 + $0x50] sm:$0xff] %v292
      %329 = vst [vmem:[#allocation7 + $0x58] sm:$0xff] %v295
      %330 = vst [vmem:[#allocation7 + $0x60] sm:$0xff] %v300
      %331 = vst [vmem:[#allocation7 + $0x68] sm:$0xff] %v303
      %332 = vst [vmem:[#allocation7 + $0x70] sm:$0xff] %v308
      %333 = vst [vmem:[#allocation7 + $0x78] sm:$0xff] %v311
    $region21: #{tpu_custom_call.1} parent=1 // pred_fallthru
      _
    %p334 = scmp.ne.s32.totalorder 0, 0
    // Predicated region
    $region22: #{tpu_custom_call.1} parent=1 // pred_check
      %p335 = pneg %p334
    $region23: #{tpu_custom_call.1} parent=1 // pred_check_branch
      %337 = sbr.rel (%p335) target = $region25
    $region24: #{tpu_custom_call.1} parent=1 // pred_region
      %v338 = vld [vmem:[#allocation7] sm:$0xff]
      %v339 = vld [vmem:[#allocation7 + $0x8] sm:$0xff]
      %v340 = vld [vmem:[#allocation7 + $0x10] sm:$0xff]
      %v341 = vld [vmem:[#allocation7 + $0x18] sm:$0xff]
      %v342 = vld [vmem:[#allocation7 + $0x20] sm:$0xff]
      %v343 = vld [vmem:[#allocation7 + $0x28] sm:$0xff]
      %v344 = vld [vmem:[#allocation7 + $0x30] sm:$0xff]
      %v345 = vld [vmem:[#allocation7 + $0x38] sm:$0xff]
      %v346 = vld [vmem:[#allocation7 + $0x40] sm:$0xff]
      %v347 = vld [vmem:[#allocation7 + $0x48] sm:$0xff]
      %v348 = vld [vmem:[#allocation7 + $0x50] sm:$0xff]
      %v349 = vld [vmem:[#allocation7 + $0x58] sm:$0xff]
      %v350 = vld [vmem:[#allocation7 + $0x60] sm:$0xff]
      %v351 = vld [vmem:[#allocation7 + $0x68] sm:$0xff]
      %v352 = vld [vmem:[#allocation7 + $0x70] sm:$0xff]
      %v353 = vld [vmem:[#allocation7 + $0x78] sm:$0xff]
      %v354 = vadd.f32 %v338, %v252
      %v355 = vadd.f32 %v339, %v255
      %v356 = vadd.f32 %v340, %v260
      %v357 = vadd.f32 %v341, %v263
      %v358 = vadd.f32 %v342, %v268
      %v359 = vadd.f32 %v343, %v271
      %v360 = vadd.f32 %v344, %v276
      %v361 = vadd.f32 %v345, %v279
      %v362 = vadd.f32 %v346, %v284
      %v363 = vadd.f32 %v347, %v287
      %v364 = vadd.f32 %v348, %v292
      %v365 = vadd.f32 %v349, %v295
      %v366 = vadd.f32 %v350, %v300
      %v367 = vadd.f32 %v351, %v303
      %v368 = vadd.f32 %v352, %v308
      %v369 = vadd.f32 %v353, %v311
      %370 = vst [vmem:[#allocation7] sm:$0xff] %v354
      %371 = vst [vmem:[#allocation7 + $0x8] sm:$0xff] %v355
      %372 = vst [vmem:[#allocation7 + $0x10] sm:$0xff] %v356
      %373 = vst [vmem:[#allocation7 + $0x18] sm:$0xff] %v357
      %374 = vst [vmem:[#allocation7 + $0x20] sm:$0xff] %v358
      %375 = vst [vmem:[#allocation7 + $0x28] sm:$0xff] %v359
      %376 = vst [vmem:[#allocation7 + $0x30] sm:$0xff] %v360
      %377 = vst [vmem:[#allocation7 + $0x38] sm:$0xff] %v361
      %378 = vst [vmem:[#allocation7 + $0x40] sm:$0xff] %v362
      %379 = vst [vmem:[#allocation7 + $0x48] sm:$0xff] %v363
      %380 = vst [vmem:[#allocation7 + $0x50] sm:$0xff] %v364
      %381 = vst [vmem:[#allocation7 + $0x58] sm:$0xff] %v365
      %382 = vst [vmem:[#allocation7 + $0x60] sm:$0xff] %v366
      %383 = vst [vmem:[#allocation7 + $0x68] sm:$0xff] %v367
      %384 = vst [vmem:[#allocation7 + $0x70] sm:$0xff] %v368
      %385 = vst [vmem:[#allocation7 + $0x78] sm:$0xff] %v369
    $region25: #{tpu_custom_call.1} parent=1 // pred_fallthru
      _
    // Predicated region
    $region26: #{tpu_custom_call.1} parent=1 // pred_check
      _
    $region27: #{tpu_custom_call.1} parent=1 // pred_check_branch
      %387 = sbr.rel (0) target = $region29
    $region28: #{tpu_custom_call.1} parent=1 // pred_region
      %s389 = ssub.s32 2048, 2048
      %390 = vsyncadd [#allocation4], %s389
      %s391 = sshll.u32 [#allocation7], 4
      %s392 = int_to_ptr.vmem [resolvable:$true] %s391
      %397 = dma.vmem_to_hbm [thread:$0]  %s392, 2048, %s2, [#allocation4], 128, 128, 8
    $region29: #{tpu_custom_call.1} parent=1 // pred_fallthru
      _
    // Predicated region
    $region30: #{tpu_custom_call.1} parent=1 // pred_check
      _
    $region31: #{tpu_custom_call.1} parent=1 // pred_check_branch
      %399 = sbr.rel (0) target = $region33
    $region32: #{tpu_custom_call.1} parent=1 // pred_region
      %400 = dma.done [#allocation4], 2048
    $region33: #{tpu_custom_call.1} parent=1 // pred_fallthru
      _
    %401 = vsyncpa [#allocation3], 1
    %402 = vsyncpa [#allocation6], 1
    %403 = vsyncpa [#allocation4], 1

</llo_original>
